<compile_context>
chip_gen: v6e
topology: v6e:2x2x1
jax: 0.10.0
libtpu: 0.0.40
codegen_flags: <defaults>
</compile_context>

<pallas_src>
import math

import jax
import jax.numpy as jnp
from jax import lax
from jax.experimental import pallas as pl
from jax.experimental.pallas import tpu as pltpu

MAX_PACKED_ROWS = 512  # packed output rows per grid step (multiple of 8)


def _embedding_kernel(idx_ref, hi_ref, mid_ref, lo_ref, out_ref):
    # idx_ref:          VMEM (R, K)            int32  idx[r, k] = id of raw row r*K + k
    # hi/mid/lo_ref:    VMEM (K*V_pad, K*D)    bf16   block-diagonal table planes
    #                                                 (hi + mid + lo == f32 table, exactly)
    # out_ref:          VMEM (R, K*D)          f32    K embedding rows packed per row
    k_pack = idx_ref.shape[1]
    kv = hi_ref.shape[0]
    v_pad = kv // k_pack

    # (1, V_pad) lane iota, broadcast inside the compare (no (R, V_pad) iota
    # materialized / held live across the block build).
    iota_v = lax.broadcasted_iota(jnp.int32, (1, v_pad), 1)

    # Multi-hot selector (R, K*V_pad): one 128-lane-aligned one-hot block per
    # packed column, built once and reused by all three plane matmuls.
    # An out-of-range id matches no lane -> zero row (OOB-safe by construction).
    parts = [
        (idx_ref[:, k:k + 1] == iota_v).astype(jnp.bfloat16)   # (R, V_pad)
        for k in range(k_pack)                                  # static, small
    ]
    multihot = parts[0] if k_pack == 1 else jnp.concatenate(parts, axis=-1)

    # Three default-precision bf16 MXU matmuls, accumulated in f32.  The
    # one-hot is exact in bf16 and each plane value is bf16-representable, so
    # the accumulated result reproduces the stored f32 rows exactly.
    acc = jnp.dot(multihot, hi_ref[...], preferred_element_type=jnp.float32)
    acc = acc + jnp.dot(multihot, mid_ref[...], preferred_element_type=jnp.float32)
    acc = acc + jnp.dot(multihot, lo_ref[...], preferred_element_type=jnp.float32)

    out_ref[...] = acc.astype(out_ref.dtype)   # single unmasked full-width store


def _split_f32_to_bf16_planes(x):
    """Exact 3-way split of an f32 array: x == hi + mid + lo, each bf16-representable."""
    def trunc_hi(v):  # zero the low 16 mantissa bits -> exactly bf16-representable
        bits = lax.bitcast_convert_type(v, jnp.uint32)
        return lax.bitcast_convert_type(bits & jnp.uint32(0xFFFF0000), jnp.float32)

    hi = trunc_hi(x)
    r1 = x - hi          # exact: <= 16 significant bits remain
    mid = trunc_hi(r1)
    lo = r1 - mid        # exact: <= 8 significant bits remain
    return (hi.astype(jnp.bfloat16), mid.astype(jnp.bfloat16),
            lo.astype(jnp.bfloat16))


def ui_embedding_forward(indices, table):
    """Pallas equivalent of UIEmbedding.forward(input): table[input].view(-1, D)."""
    v, d = table.shape

    flat_idx = indices.reshape(-1).astype(jnp.int32)
    n = flat_idx.shape[0]

    # Lane packing factor so each packed output row is a multiple of 128 lanes.
    k_pack = 128 // math.gcd(d, 128)

    # Tile sizing: >= 2 grid steps when there is enough work (v7x megacore),
    # tiles capped at MAX_PACKED_ROWS, always sublane (8) aligned.
    packed_rows = pl.cdiv(n, k_pack)
    n_steps_target = max(2, pl.cdiv(packed_rows, MAX_PACKED_ROWS)) if packed_rows > 8 else 1
    r_step = min(MAX_PACKED_ROWS,
                 max(8, pl.cdiv(pl.cdiv(packed_rows, n_steps_target), 8) * 8))
    n_steps = pl.cdiv(packed_rows, r_step)

    n_pad = n_steps * r_step * k_pack
    if n_pad != n:
        # Padded ids select row 0; padded rows are sliced off after the call.
        flat_idx = jnp.pad(flat_idx, (0, n_pad - n))
    idx2d = flat_idx.reshape(n_pad // k_pack, k_pack)

    # Pad vocab to a lane/MXU-aligned contraction depth (padded rows are zero).
    v_pad = pl.cdiv(v, 128) * 128
    table_p = jnp.pad(table, ((0, v_pad - v), (0, 0))) if v_pad != v else table

    # Exact bf16 planes, each expanded to the block-diagonal fused RHS
    # (K*V_pad, K*D).  Only sensible for small vocabularies (see TODO above).
    eye = jnp.eye(k_pack, dtype=jnp.bfloat16)
    planes = [jnp.kron(eye, p) for p in _split_f32_to_bf16_planes(table_p)]
    kv, kd = k_pack * v_pad, k_pack * d

    grid_spec = pltpu.PrefetchScalarGridSpec(
        num_scalar_prefetch=0,
        grid=(n_steps,),
        in_specs=[
            # Lane-sparse but tiny index tile (only ~KBs even at r_step=512).
            pl.BlockSpec((r_step, k_pack), lambda s: (s, 0)),
            # Block-diagonal planes: constant block index -> DMA'd once, resident.
            pl.BlockSpec((kv, kd), lambda s: (0, 0)),
            pl.BlockSpec((kv, kd), lambda s: (0, 0)),
            pl.BlockSpec((kv, kd), lambda s: (0, 0)),
        ],
        out_specs=pl.BlockSpec((r_step, kd), lambda s: (s, 0)),
    )

    cost = pl.CostEstimate(
        flops=2 * 3 * (n_steps * r_step) * kv * kd,          # 3 bf16 planes
        transcendentals=0,
        bytes_accessed=(n_pad * 4                            # indices
                        + 3 * kv * kd * 2                    # bf16 planes
                        + (n_steps * r_step) * kd * 4),      # output
    )

    out_packed = pl.pallas_call(
        _embedding_kernel,
        out_shape=jax.ShapeDtypeStruct((n_pad // k_pack, kd), table.dtype),
        grid_spec=grid_spec,
        compiler_params=pltpu.CompilerParams(
            dimension_semantics=("parallel",)),   # independent tiles -> 2 TCs on v7x
        cost_estimate=cost,
    )(idx2d, *planes)

    # (n_pad//K, K*D) row-major is exactly (n_pad, D) row-major: free reshape.
    out = out_packed.reshape(n_pad, d)
    return out if n_pad == n else out[:n]


def make_ui_embedding_params(key, latent_dim, obj_num):
    # nn.Embedding(obj_num + 1, latent_dim).weight with xavier_normal_ init:
    # std = gain * sqrt(2 / (fan_in + fan_out)), gain = 1.
    v = obj_num + 1
    std = (2.0 / (v + latent_dim)) ** 0.5
    return jax.random.normal(key, (v, latent_dim), dtype=jnp.float32) * std


if __name__ == "__main__":
    latent_dim = 32
    obj_num = 100

    key = jax.random.PRNGKey(0)
    k_tab, k_idx = jax.random.split(key)

    table = make_ui_embedding_params(k_tab, latent_dim, obj_num)
    # Batch of 4 sequences of 8 ids (forward flattens to (-1, D)).  n = 32 is a
    # multiple of k_pack * r_step here, so no padding / post-kernel slice copy.
    idx = jax.random.randint(k_idx, (4, 8), 0, obj_num + 1, dtype=jnp.int32)

    out = jax.block_until_ready(ui_embedding_forward(idx, table))

    # Pure-JAX reference check.
    ref = jnp.take(table, idx.reshape(-1), axis=0)
    assert out.shape == (idx.size, latent_dim), out.shape
    assert out.dtype == jnp.float32
    assert jnp.allclose(out, ref, rtol=1e-6, atol=1e-6), "mismatch vs reference gather"
    print("KERNEL_OK")
</pallas_src>

<mosaic_0001>
module attributes {stable_mosaic.version = 11 : i64} {
  func.func @_embedding_kernel(%arg0: i32, %arg1: memref<8x4xi32, #tpu.memory_space<vmem>>, %arg2: memref<512x128xbf16, #tpu.memory_space<vmem>>, %arg3: memref<512x128xbf16, #tpu.memory_space<vmem>>, %arg4: memref<512x128xbf16, #tpu.memory_space<vmem>>, %arg5: memref<8x128xf32, #tpu.memory_space<vmem>>) attributes {dimension_semantics = [#tpu.dimension_semantics<parallel>], iteration_bounds = array<i64: 1>, scalar_prefetch = 0 : i64, scratch_operands = 0 : i64, tpu.core_type = #tpu.core_type<tc>, window_params = [{transform_indices = @transform_0, window_bounds = array<i64: 8, 4>}, {pipeline_mode = #tpu.pipeline_mode<synchronous>, transform_indices = @transform_1, window_bounds = array<i64: 512, 128>}, {pipeline_mode = #tpu.pipeline_mode<synchronous>, transform_indices = @transform_2, window_bounds = array<i64: 512, 128>}, {pipeline_mode = #tpu.pipeline_mode<synchronous>, transform_indices = @transform_3, window_bounds = array<i64: 512, 128>}, {transform_indices = @transform_4, window_bounds = array<i64: 8, 128>}]} {
    %0 = tpu.iota {dimensions = array<i32: 1>} : vector<1x128xi32>
    %c0 = arith.constant 0 : index
    %c0_0 = arith.constant 0 : index
    %1 = vector.load %arg1[%c0, %c0_0] : memref<8x4xi32, #tpu.memory_space<vmem>>, vector<8x1xi32>
    %2 = vector.broadcast %1 : vector<8x1xi32> to vector<8x128xi32>
    %3 = vector.broadcast %0 : vector<1x128xi32> to vector<8x128xi32>
    %4 = arith.cmpi eq, %2, %3 : vector<8x128xi32>
    %5 = arith.extui %4 : vector<8x128xi1> to vector<8x128xi32>
    %6 = arith.sitofp %5 : vector<8x128xi32> to vector<8x128xf32>
    %7 = arith.truncf %6 : vector<8x128xf32> to vector<8x128xbf16>
    %c0_1 = arith.constant 0 : index
    %c1 = arith.constant 1 : index
    %8 = vector.load %arg1[%c0_1, %c1] : memref<8x4xi32, #tpu.memory_space<vmem>>, vector<8x1xi32>
    %9 = vector.broadcast %8 : vector<8x1xi32> to vector<8x128xi32>
    %10 = vector.broadcast %0 : vector<1x128xi32> to vector<8x128xi32>
    %11 = arith.cmpi eq, %9, %10 : vector<8x128xi32>
    %12 = arith.extui %11 : vector<8x128xi1> to vector<8x128xi32>
    %13 = arith.sitofp %12 : vector<8x128xi32> to vector<8x128xf32>
    %14 = arith.truncf %13 : vector<8x128xf32> to vector<8x128xbf16>
    %c0_2 = arith.constant 0 : index
    %c2 = arith.constant 2 : index
    %15 = vector.load %arg1[%c0_2, %c2] : memref<8x4xi32, #tpu.memory_space<vmem>>, vector<8x1xi32>
    %16 = vector.broadcast %15 : vector<8x1xi32> to vector<8x128xi32>
    %17 = vector.broadcast %0 : vector<1x128xi32> to vector<8x128xi32>
    %18 = arith.cmpi eq, %16, %17 : vector<8x128xi32>
    %19 = arith.extui %18 : vector<8x128xi1> to vector<8x128xi32>
    %20 = arith.sitofp %19 : vector<8x128xi32> to vector<8x128xf32>
    %21 = arith.truncf %20 : vector<8x128xf32> to vector<8x128xbf16>
    %c0_3 = arith.constant 0 : index
    %c3 = arith.constant 3 : index
    %22 = vector.load %arg1[%c0_3, %c3] : memref<8x4xi32, #tpu.memory_space<vmem>>, vector<8x1xi32>
    %23 = vector.broadcast %22 : vector<8x1xi32> to vector<8x128xi32>
    %24 = vector.broadcast %0 : vector<1x128xi32> to vector<8x128xi32>
    %25 = arith.cmpi eq, %23, %24 : vector<8x128xi32>
    %26 = arith.extui %25 : vector<8x128xi1> to vector<8x128xi32>
    %27 = arith.sitofp %26 : vector<8x128xi32> to vector<8x128xf32>
    %28 = arith.truncf %27 : vector<8x128xf32> to vector<8x128xbf16>
    %29 = tpu.concatenate %7, %14, %21, %28 in 1 : vector<8x128xbf16>, vector<8x128xbf16>, vector<8x128xbf16>, vector<8x128xbf16> -> vector<8x512xbf16>
    %c0_4 = arith.constant 0 : index
    %c0_5 = arith.constant 0 : index
    %30 = vector.load %arg2[%c0_4, %c0_5] : memref<512x128xbf16, #tpu.memory_space<vmem>>, vector<512x128xbf16>
    %cst = arith.constant dense<0.000000e+00> : vector<8x128xf32>
    %31 = tpu.matmul %29, %30, %cst {dimension_numbers = #tpu.dot_dimension_numbers<[1], [0], [0], [1], [0, 0, 1, 1], [], []>} : vector<8x512xbf16>, vector<512x128xbf16>, vector<8x128xf32> -> vector<8x128xf32>
    %c0_6 = arith.constant 0 : index
    %c0_7 = arith.constant 0 : index
    %32 = vector.load %arg3[%c0_6, %c0_7] : memref<512x128xbf16, #tpu.memory_space<vmem>>, vector<512x128xbf16>
    %cst_8 = arith.constant dense<0.000000e+00> : vector<8x128xf32>
    %33 = tpu.matmul %29, %32, %cst_8 {dimension_numbers = #tpu.dot_dimension_numbers<[1], [0], [0], [1], [0, 0, 1, 1], [], []>} : vector<8x512xbf16>, vector<512x128xbf16>, vector<8x128xf32> -> vector<8x128xf32>
    %34 = arith.addf %31, %33 : vector<8x128xf32>
    %c0_9 = arith.constant 0 : index
    %c0_10 = arith.constant 0 : index
    %35 = vector.load %arg4[%c0_9, %c0_10] : memref<512x128xbf16, #tpu.memory_space<vmem>>, vector<512x128xbf16>
    %cst_11 = arith.constant dense<0.000000e+00> : vector<8x128xf32>
    %36 = tpu.matmul %29, %35, %cst_11 {dimension_numbers = #tpu.dot_dimension_numbers<[1], [0], [0], [1], [0, 0, 1, 1], [], []>} : vector<8x512xbf16>, vector<512x128xbf16>, vector<8x128xf32> -> vector<8x128xf32>
    %37 = arith.addf %34, %36 : vector<8x128xf32>
    %c0_12 = arith.constant 0 : index
    %c0_13 = arith.constant 0 : index
    %38 = vector.load %arg5[%c0_12, %c0_13] : memref<8x128xf32, #tpu.memory_space<vmem>>, vector<8x128xf32>
    tpu.vector_store %arg5[%c0_12, %c0_13], %37 {strides = array<i32>} : memref<8x128xf32, #tpu.memory_space<vmem>>, vector<8x128xf32>,
    return
  }
  func.func @transform_0(%arg0: i32) -> (i32, i32) {
    %c0_i32 = arith.constant 0 : i32
    %c0_i32_0 = arith.constant 0 : i32
    return %arg0, %c0_i32 : i32, i32
  }
  func.func @transform_1(%arg0: i32) -> (i32, i32) {
    %c0_i32 = arith.constant 0 : i32
    %c0_i32_0 = arith.constant 0 : i32
    %c0_i32_1 = arith.constant 0 : i32
    return %c0_i32, %c0_i32_0 : i32, i32
  }
  func.func @transform_2(%arg0: i32) -> (i32, i32) {
    %c0_i32 = arith.constant 0 : i32
    %c0_i32_0 = arith.constant 0 : i32
    %c0_i32_1 = arith.constant 0 : i32
    return %c0_i32, %c0_i32_0 : i32, i32
  }
  func.func @transform_3(%arg0: i32) -> (i32, i32) {
    %c0_i32 = arith.constant 0 : i32
    %c0_i32_0 = arith.constant 0 : i32
    %c0_i32_1 = arith.constant 0 : i32
    return %c0_i32, %c0_i32_0 : i32, i32
  }
  func.func @transform_4(%arg0: i32) -> (i32, i32) {
    %c0_i32 = arith.constant 0 : i32
    %c0_i32_0 = arith.constant 0 : i32
    return %arg0, %c0_i32 : i32, i32
  }
}

</mosaic_0001>

<llo_original>
// kernel: tpu_custom_call.1
$region0: #{tpu_custom_call.1}
  #allocation0 [shape = 'u32[]', space=smem, size = 0x4, offset = 0x4, fixed_abs, tag = 'smem constant byte address 0x4 - core index']
  #allocation1 [shape = 'u32[144,128]{1,0:T(1,128)}', space=vmem, size = 0x12000, scoped, tag = 'internal scratch']
  %s0 = inlined_call_operand.vmem [shape: s32[8,4], index: 0, kind: input, shape index: {}]
  %s1 = inlined_call_operand.hbm [shape: bf16[512,128], index: 1, kind: input, shape index: {}]
  %s2 = inlined_call_operand.hbm [shape: bf16[512,128], index: 2, kind: input, shape index: {}]
  %s3 = inlined_call_operand.hbm [shape: bf16[512,128], index: 3, kind: input, shape index: {}]
  %s4 = inlined_call_operand.hbm [shape: f32[8,128], index: 4, kind: output, shape index: {}]
  %s5 = sld [smem:[#allocation0]]
  $region38: #{tpu_custom_call.1} parent=0
    _
  %s7 = ssub.s32 1, %s5
  %s8 = scalar_select 0, %s7, %s5
  $region1: #{tpu_custom_call.1} parent=0
    #allocation2 [shape = 'u8[131072]{0}', space=vmem, size = 0x20000, scoped, tag = 'input window, operand 1, single buffered']
    #allocation3 [shape = 's32[1]{0}', space=sflag, size = 0x4, scoped, tag = 'scoped memory for tpu_custom_call.1']
    #allocation4 [shape = 's32[1]{0}', space=sflag, size = 0x4, scoped, tag = 'scoped memory for tpu_custom_call.1']
    #allocation5 [shape = 'u8[131072]{0}', space=vmem, size = 0x20000, scoped, tag = 'input window, operand 2, single buffered']
    #allocation6 [shape = 's32[1]{0}', space=sflag, size = 0x4, scoped, tag = 'scoped memory for tpu_custom_call.1']
    #allocation7 [shape = 'u8[131072]{0}', space=vmem, size = 0x20000, scoped, tag = 'input window, operand 3, single buffered']
    #allocation8 [shape = 'u8[4096]{0}', space=vmem, size = 0x1000, scoped, tag = 'output window, operand 0, single buffered']
    %9 = vsyncpa [#allocation3], 0
    %10 = vsyncpa [#allocation6], 0
    %11 = vsyncpa [#allocation4], 0
    // Predicated region
    $region2: #{tpu_custom_call.1} parent=1 // pred_check
      _
    $region3: #{tpu_custom_call.1} parent=1 // pred_check_branch
      %13 = sbr.rel (0) target = $region5
    $region4: #{tpu_custom_call.1} parent=1 // pred_region
      _
    $region5: #{tpu_custom_call.1} parent=1 // pred_fallthru
      _
    // Predicated region
    $region6: #{tpu_custom_call.1} parent=1 // pred_check
      _
    $region7: #{tpu_custom_call.1} parent=1 // pred_check_branch
      %15 = sbr.rel (0) target = $region9
    $region8: #{tpu_custom_call.1} parent=1 // pred_region
      %s17 = ssub.s32 4096, 4096
      %18 = vsyncadd [#allocation3], %s17
      %s19 = sshll.u32 [#allocation2], 4
      %s20 = int_to_ptr.vmem [resolvable:$true] %s19
      %25 = dma.hbm_to_vmem [thread:$0]  %s1, 4096, %s20, [#allocation3], 64, 64, 4
    $region9: #{tpu_custom_call.1} parent=1 // pred_fallthru
      _
    // Predicated region
    $region10: #{tpu_custom_call.1} parent=1 // pred_check
      _
    $region11: #{tpu_custom_call.1} parent=1 // pred_check_branch
      %27 = sbr.rel (0) target = $region13
    $region12: #{tpu_custom_call.1} parent=1 // pred_region
      %s29 = ssub.s32 4096, 4096
      %30 = vsyncadd [#allocation6], %s29
      %s31 = sshll.u32 [#allocation5], 4
      %s32 = int_to_ptr.vmem [resolvable:$true] %s31
      %37 = dma.hbm_to_vmem [thread:$0]  %s2, 4096, %s32, [#allocation6], 64, 64, 4
    $region13: #{tpu_custom_call.1} parent=1 // pred_fallthru
      _
    // Predicated region
    $region14: #{tpu_custom_call.1} parent=1 // pred_check
      _
    $region15: #{tpu_custom_call.1} parent=1 // pred_check_branch
      %39 = sbr.rel (0) target = $region17
    $region16: #{tpu_custom_call.1} parent=1 // pred_region
      %s41 = ssub.s32 4096, 4096
      %42 = vsyncadd [#allocation6], %s41
      %s43 = sshll.u32 [#allocation7], 4
      %s44 = int_to_ptr.vmem [resolvable:$true] %s43
      %49 = dma.hbm_to_vmem [thread:$0]  %s3, 4096, %s44, [#allocation6], 64, 64, 4
    $region17: #{tpu_custom_call.1} parent=1 // pred_fallthru
      _
    // Predicated region
    $region18: #{tpu_custom_call.1} parent=1 // pred_check
      _
    $region19: #{tpu_custom_call.1} parent=1 // pred_check_branch
      %51 = sbr.rel (0) target = $region21
    $region20: #{tpu_custom_call.1} parent=1 // pred_region
      %52 = dma.done [#allocation3], 4096
    $region21: #{tpu_custom_call.1} parent=1 // pred_fallthru
      _
    // Predicated region
    $region22: #{tpu_custom_call.1} parent=1 // pred_check
      _
    $region23: #{tpu_custom_call.1} parent=1 // pred_check_branch
      %54 = sbr.rel (0) target = $region25
    $region24: #{tpu_custom_call.1} parent=1 // pred_region
      %55 = dma.done [#allocation6], 4096
    $region25: #{tpu_custom_call.1} parent=1 // pred_fallthru
      _
    // Predicated region
    $region26: #{tpu_custom_call.1} parent=1 // pred_check
      _
    $region27: #{tpu_custom_call.1} parent=1 // pred_check_branch
      %57 = sbr.rel (0) target = $region29
    $region28: #{tpu_custom_call.1} parent=1 // pred_region
      %58 = dma.done [#allocation6], 4096
    $region29: #{tpu_custom_call.1} parent=1 // pred_fallthru
      _
    %v60 = vlaneseq
    %v61 = vand.u32 %v60, 127
    %v62 = vld [vmem:[%s0] sm:$0xff]
    %63 = vset.pattern.permute.xlu0 0
    %64 = vperm.xlu0 %63, %v62
    %v65 = vpop.permute.xlu0 %64
    %vm66 = vcmp.eq.s32.totalorder %v65, %v61
    %v67 = vsel %vm66, 1, 0
    %v68 = vcvt.s32.f32 %v67
    %v69 = vpack.c.bf16 %v68, %v68
    %70 = vset.pattern.permute.xlu0 1
    %71 = vperm.xlu0 %70, %v62
    %v72 = vpop.permute.xlu0 %71
    %vm73 = vcmp.eq.s32.totalorder %v72, %v61
    %v74 = vsel %vm73, 1, 0
    %v75 = vcvt.s32.f32 %v74
    %v76 = vpack.c.bf16 %v75, %v75
    %77 = vset.pattern.permute.xlu0 2
    %78 = vperm.xlu0 %77, %v62
    %v79 = vpop.permute.xlu0 %78
    %vm80 = vcmp.eq.s32.totalorder %v79, %v61
    %v81 = vsel %vm80, 1, 0
    %v82 = vcvt.s32.f32 %v81
    %v83 = vpack.c.bf16 %v82, %v82
    %84 = vset.pattern.permute.xlu0 3
    %85 = vperm.xlu0 %84, %v62
    %v86 = vpop.permute.xlu0 %85
    %vm87 = vcmp.eq.s32.totalorder %v86, %v61
    %v88 = vsel %vm87, 1, 0
    %v89 = vcvt.s32.f32 %v88
    %v90 = vpack.c.bf16 %v89, %v89
    %v91 = vld [vmem:[#allocation2] sm:$0xf]
    %v92 = vld [vmem:[#allocation2 + $0x4] sm:$0xf]
    %v93 = vld [vmem:[#allocation2 + $0x8] sm:$0xf]
    %v94 = vld [vmem:[#allocation2 + $0xc] sm:$0xf]
    %v95 = vld [vmem:[#allocation2 + $0x10] sm:$0xf]
    %v96 = vld [vmem:[#allocation2 + $0x14] sm:$0xf]
    %v97 = vld [vmem:[#allocation2 + $0x18] sm:$0xf]
    %v98 = vld [vmem:[#allocation2 + $0x1c] sm:$0xf]
    %v99 = vld [vmem:[#allocation2 + $0x20] sm:$0xf]
    %v100 = vld [vmem:[#allocation2 + $0x24] sm:$0xf]
    %v101 = vld [vmem:[#allocation2 + $0x28] sm:$0xf]
    %v102 = vld [vmem:[#allocation2 + $0x2c] sm:$0xf]
    %v103 = vld [vmem:[#allocation2 + $0x30] sm:$0xf]
    %v104 = vld [vmem:[#allocation2 + $0x34] sm:$0xf]
    %v105 = vld [vmem:[#allocation2 + $0x38] sm:$0xf]
    %v106 = vld [vmem:[#allocation2 + $0x3c] sm:$0xf]
    %v107 = vld [vmem:[#allocation2 + $0x40] sm:$0xf]
    %v108 = vld [vmem:[#allocation2 + $0x44] sm:$0xf]
    %v109 = vld [vmem:[#allocation2 + $0x48] sm:$0xf]
    %v110 = vld [vmem:[#allocation2 + $0x4c] sm:$0xf]
    %v111 = vld [vmem:[#allocation2 + $0x50] sm:$0xf]
    %v112 = vld [vmem:[#allocation2 + $0x54] sm:$0xf]
    %v113 = vld [vmem:[#allocation2 + $0x58] sm:$0xf]
    %v114 = vld [vmem:[#allocation2 + $0x5c] sm:$0xf]
    %v115 = vld [vmem:[#allocation2 + $0x60] sm:$0xf]
    %v116 = vld [vmem:[#allocation2 + $0x64] sm:$0xf]
    %v117 = vld [vmem:[#allocation2 + $0x68] sm:$0xf]
    %v118 = vld [vmem:[#allocation2 + $0x6c] sm:$0xf]
    %v119 = vld [vmem:[#allocation2 + $0x70] sm:$0xf]
    %v120 = vld [vmem:[#allocation2 + $0x74] sm:$0xf]
    %v121 = vld [vmem:[#allocation2 + $0x78] sm:$0xf]
    %v122 = vld [vmem:[#allocation2 + $0x7c] sm:$0xf]
    %v123 = vld [vmem:[#allocation2 + $0x80] sm:$0xf]
    %v124 = vld [vmem:[#allocation2 + $0x84] sm:$0xf]
    %v125 = vld [vmem:[#allocation2 + $0x88] sm:$0xf]
    %v126 = vld [vmem:[#allocation2 + $0x8c] sm:$0xf]
    %v127 = vld [vmem:[#allocation2 + $0x90] sm:$0xf]
    %v128 = vld [vmem:[#allocation2 + $0x94] sm:$0xf]
    %v129 = vld [vmem:[#allocation2 + $0x98] sm:$0xf]
    %v130 = vld [vmem:[#allocation2 + $0x9c] sm:$0xf]
    %v131 = vld [vmem:[#allocation2 + $0xa0] sm:$0xf]
    %v132 = vld [vmem:[#allocation2 + $0xa4] sm:$0xf]
    %v133 = vld [vmem:[#allocation2 + $0xa8] sm:$0xf]
    %v134 = vld [vmem:[#allocation2 + $0xac] sm:$0xf]
    %v135 = vld [vmem:[#allocation2 + $0xb0] sm:$0xf]
    %v136 = vld [vmem:[#allocation2 + $0xb4] sm:$0xf]
    %v137 = vld [vmem:[#allocation2 + $0xb8] sm:$0xf]
    %v138 = vld [vmem:[#allocation2 + $0xbc] sm:$0xf]
    %v139 = vld [vmem:[#allocation2 + $0xc0] sm:$0xf]
    %v140 = vld [vmem:[#allocation2 + $0xc4] sm:$0xf]
    %v141 = vld [vmem:[#allocation2 + $0xc8] sm:$0xf]
    %v142 = vld [vmem:[#allocation2 + $0xcc] sm:$0xf]
    %v143 = vld [vmem:[#allocation2 + $0xd0] sm:$0xf]
    %v144 = vld [vmem:[#allocation2 + $0xd4] sm:$0xf]
    %v145 = vld [vmem:[#allocation2 + $0xd8] sm:$0xf]
    %v146 = vld [vmem:[#allocation2 + $0xdc] sm:$0xf]
    %v147 = vld [vmem:[#allocation2 + $0xe0] sm:$0xf]
    %v148 = vld [vmem:[#allocation2 + $0xe4] sm:$0xf]
    %v149 = vld [vmem:[#allocation2 + $0xe8] sm:$0xf]
    %v150 = vld [vmem:[#allocation2 + $0xec] sm:$0xf]
    %v151 = vld [vmem:[#allocation2 + $0xf0] sm:$0xf]
    %v152 = vld [vmem:[#allocation2 + $0xf4] sm:$0xf]
    %v153 = vld [vmem:[#allocation2 + $0xf8] sm:$0xf]
    %v154 = vld [vmem:[#allocation2 + $0xfc] sm:$0xf]
    %v155 = vld [vmem:[#allocation5] sm:$0xf]
    %v156 = vld [vmem:[#allocation5 + $0x4] sm:$0xf]
    %v157 = vld [vmem:[#allocation5 + $0x8] sm:$0xf]
    %v158 = vld [vmem:[#allocation5 + $0xc] sm:$0xf]
    %v159 = vld [vmem:[#allocation5 + $0x10] sm:$0xf]
    %v160 = vld [vmem:[#allocation5 + $0x14] sm:$0xf]
    %v161 = vld [vmem:[#allocation5 + $0x18] sm:$0xf]
    %v162 = vld [vmem:[#allocation5 + $0x1c] sm:$0xf]
    %v163 = vld [vmem:[#allocation5 + $0x20] sm:$0xf]
    %v164 = vld [vmem:[#allocation5 + $0x24] sm:$0xf]
    %v165 = vld [vmem:[#allocation5 + $0x28] sm:$0xf]
    %v166 = vld [vmem:[#allocation5 + $0x2c] sm:$0xf]
    %v167 = vld [vmem:[#allocation5 + $0x30] sm:$0xf]
    %v168 = vld [vmem:[#allocation5 + $0x34] sm:$0xf]
    %v169 = vld [vmem:[#allocation5 + $0x38] sm:$0xf]
    %v170 = vld [vmem:[#allocation5 + $0x3c] sm:$0xf]
    %v171 = vld [vmem:[#allocation5 + $0x40] sm:$0xf]
    %v172 = vld [vmem:[#allocation5 + $0x44] sm:$0xf]
    %v173 = vld [vmem:[#allocation5 + $0x48] sm:$0xf]
    %v174 = vld [vmem:[#allocation5 + $0x4c] sm:$0xf]
    %v175 = vld [vmem:[#allocation5 + $0x50] sm:$0xf]
    %v176 = vld [vmem:[#allocation5 + $0x54] sm:$0xf]
    %v177 = vld [vmem:[#allocation5 + $0x58] sm:$0xf]
    %v178 = vld [vmem:[#allocation5 + $0x5c] sm:$0xf]
    %v179 = vld [vmem:[#allocation5 + $0x60] sm:$0xf]
    %v180 = vld [vmem:[#allocation5 + $0x64] sm:$0xf]
    %v181 = vld [vmem:[#allocation5 + $0x68] sm:$0xf]
    %v182 = vld [vmem:[#allocation5 + $0x6c] sm:$0xf]
    %v183 = vld [vmem:[#allocation5 + $0x70] sm:$0xf]
    %v184 = vld [vmem:[#allocation5 + $0x74] sm:$0xf]
    %v185 = vld [vmem:[#allocation5 + $0x78] sm:$0xf]
    %v186 = vld [vmem:[#allocation5 + $0x7c] sm:$0xf]
    %v187 = vld [vmem:[#allocation5 + $0x80] sm:$0xf]
    %v188 = vld [vmem:[#allocation5 + $0x84] sm:$0xf]
    %v189 = vld [vmem:[#allocation5 + $0x88] sm:$0xf]
    %v190 = vld [vmem:[#allocation5 + $0x8c] sm:$0xf]
    %v191 = vld [vmem:[#allocation5 + $0x90] sm:$0xf]
    %v192 = vld [vmem:[#allocation5 + $0x94] sm:$0xf]
    %v193 = vld [vmem:[#allocation5 + $0x98] sm:$0xf]
    %v194 = vld [vmem:[#allocation5 + $0x9c] sm:$0xf]
    %v195 = vld [vmem:[#allocation5 + $0xa0] sm:$0xf]
    %v196 = vld [vmem:[#allocation5 + $0xa4] sm:$0xf]
    %v197 = vld [vmem:[#allocation5 + $0xa8] sm:$0xf]
    %v198 = vld [vmem:[#allocation5 + $0xac] sm:$0xf]
    %v199 = vld [vmem:[#allocation5 + $0xb0] sm:$0xf]
    %v200 = vld [vmem:[#allocation5 + $0xb4] sm:$0xf]
    %v201 = vld [vmem:[#allocation5 + $0xb8] sm:$0xf]
    %v202 = vld [vmem:[#allocation5 + $0xbc] sm:$0xf]
    %v203 = vld [vmem:[#allocation5 + $0xc0] sm:$0xf]
    %v204 = vld [vmem:[#allocation5 + $0xc4] sm:$0xf]
    %v205 = vld [vmem:[#allocation5 + $0xc8] sm:$0xf]
    %v206 = vld [vmem:[#allocation5 + $0xcc] sm:$0xf]
    %v207 = vld [vmem:[#allocation5 + $0xd0] sm:$0xf]
    %v208 = vld [vmem:[#allocation5 + $0xd4] sm:$0xf]
    %v209 = vld [vmem:[#allocation5 + $0xd8] sm:$0xf]
    %v210 = vld [vmem:[#allocation5 + $0xdc] sm:$0xf]
    %v211 = vld [vmem:[#allocation5 + $0xe0] sm:$0xf]
    %v212 = vld [vmem:[#allocation5 + $0xe4] sm:$0xf]
    %v213 = vld [vmem:[#allocation5 + $0xe8] sm:$0xf]
    %v214 = vld [vmem:[#allocation5 + $0xec] sm:$0xf]
    %v215 = vld [vmem:[#allocation5 + $0xf0] sm:$0xf]
    %v216 = vld [vmem:[#allocation5 + $0xf4] sm:$0xf]
    %v217 = vld [vmem:[#allocation5 + $0xf8] sm:$0xf]
    %v218 = vld [vmem:[#allocation5 + $0xfc] sm:$0xf]
    %v283 = vunpack.c.l.b16 %v155
    %v284 = vunpack.c.l.b16 %v156
    %v285 = vunpack.c.l.b16 %v157
    %v286 = vunpack.c.l.b16 %v158
    %v287 = vunpack.c.l.b16 %v159
    %v288 = vunpack.c.l.b16 %v160
    %v289 = vunpack.c.l.b16 %v161
    %v290 = vunpack.c.l.b16 %v162
    %v291 = vunpack.c.l.b16 %v163
    %v292 = vunpack.c.l.b16 %v164
    %v293 = vunpack.c.l.b16 %v165
    %v294 = vunpack.c.l.b16 %v166
    %v295 = vunpack.c.l.b16 %v167
    %v296 = vunpack.c.l.b16 %v168
    %v297 = vunpack.c.l.b16 %v169
    %v298 = vunpack.c.l.b16 %v170
    %v299 = vunpack.c.l.b16 %v171
    %v300 = vunpack.c.l.b16 %v172
    %v301 = vunpack.c.l.b16 %v173
    %v302 = vunpack.c.l.b16 %v174
    %v303 = vunpack.c.l.b16 %v175
    %v304 = vunpack.c.l.b16 %v176
    %v305 = vunpack.c.l.b16 %v177
    %v306 = vunpack.c.l.b16 %v178
    %v307 = vunpack.c.l.b16 %v179
    %v308 = vunpack.c.l.b16 %v180
    %v309 = vunpack.c.l.b16 %v181
    %v310 = vunpack.c.l.b16 %v182
    %v311 = vunpack.c.l.b16 %v183
    %v312 = vunpack.c.l.b16 %v184
    %v313 = vunpack.c.l.b16 %v185
    %v314 = vunpack.c.l.b16 %v186
    %v315 = vunpack.c.l.b16 %v187
    %v316 = vunpack.c.l.b16 %v188
    %v317 = vunpack.c.l.b16 %v189
    %v318 = vunpack.c.l.b16 %v190
    %v319 = vunpack.c.l.b16 %v191
    %v320 = vunpack.c.l.b16 %v192
    %v321 = vunpack.c.l.b16 %v193
    %v322 = vunpack.c.l.b16 %v194
    %v323 = vunpack.c.l.b16 %v195
    %v324 = vunpack.c.l.b16 %v196
    %v325 = vunpack.c.l.b16 %v197
    %v326 = vunpack.c.l.b16 %v198
    %v327 = vunpack.c.l.b16 %v199
    %v328 = vunpack.c.l.b16 %v200
    %v329 = vunpack.c.l.b16 %v201
    %v330 = vunpack.c.l.b16 %v202
    %v331 = vunpack.c.l.b16 %v203
    %v332 = vunpack.c.l.b16 %v204
    %v333 = vunpack.c.l.b16 %v205
    %v334 = vunpack.c.l.b16 %v206
    %v335 = vunpack.c.l.b16 %v207
    %v336 = vunpack.c.l.b16 %v208
    %v337 = vunpack.c.l.b16 %v209
    %v338 = vunpack.c.l.b16 %v210
    %v339 = vunpack.c.l.b16 %v211
    %v340 = vunpack.c.l.b16 %v212
    %v341 = vunpack.c.l.b16 %v213
    %v342 = vunpack.c.l.b16 %v214
    %v343 = vunpack.c.l.b16 %v215
    %v344 = vunpack.c.l.b16 %v216
    %v345 = vunpack.c.l.b16 %v217
    %v346 = vunpack.c.l.b16 %v218
    %v347 = vpack.c.b16 %v284, %v283
    %v348 = vpack.c.b16 %v286, %v285
    %v349 = vpack.c.b16 %v288, %v287
    %v350 = vpack.c.b16 %v290, %v289
    %v351 = vpack.c.b16 %v292, %v291
    %v352 = vpack.c.b16 %v294, %v293
    %v353 = vpack.c.b16 %v296, %v295
    %v354 = vpack.c.b16 %v298, %v297
    %v355 = vpack.c.b16 %v300, %v299
    %v356 = vpack.c.b16 %v302, %v301
    %v357 = vpack.c.b16 %v304, %v303
    %v358 = vpack.c.b16 %v306, %v305
    %v359 = vpack.c.b16 %v308, %v307
    %v360 = vpack.c.b16 %v310, %v309
    %v361 = vpack.c.b16 %v312, %v311
    %v362 = vpack.c.b16 %v314, %v313
    %v363 = vpack.c.b16 %v316, %v315
    %v364 = vpack.c.b16 %v318, %v317
    %v365 = vpack.c.b16 %v320, %v319
    %v366 = vpack.c.b16 %v322, %v321
    %v367 = vpack.c.b16 %v324, %v323
    %v368 = vpack.c.b16 %v326, %v325
    %v369 = vpack.c.b16 %v328, %v327
    %v370 = vpack.c.b16 %v330, %v329
    %v371 = vpack.c.b16 %v332, %v331
    %v372 = vpack.c.b16 %v334, %v333
    %v373 = vpack.c.b16 %v336, %v335
    %v374 = vpack.c.b16 %v338, %v337
    %v375 = vpack.c.b16 %v340, %v339
    %v376 = vpack.c.b16 %v342, %v341
    %v377 = vpack.c.b16 %v344, %v343
    %v378 = vpack.c.b16 %v346, %v345
    %411 = vmatprep.subr.bf16.mxu0 0
    %412 = vmatpush1.bf16.msra.mxu0 %v354
    %413 = vmatprep.subr.bf16.mxu0 0
    %414 = vmatpush1.bf16.msra.mxu0 %v353
    %415 = vmatprep.subr.bf16.mxu0 0
    %416 = vmatpush1.bf16.msra.mxu0 %v352
    %417 = vmatprep.subr.bf16.mxu0 0
    %418 = vmatpush1.bf16.msra.mxu0 %v351
    %419 = vmatprep.subr.bf16.mxu0 0
    %420 = vmatpush1.bf16.msra.mxu0 %v350
    %421 = vmatprep.subr.bf16.mxu0 0
    %422 = vmatpush1.bf16.msra.mxu0 %v349
    %423 = vmatprep.subr.bf16.mxu0 0
    %424 = vmatpush1.bf16.msra.mxu0 %v348
    %425 = vmatprep.subr.bf16.mxu0 0
    %426 = vmatpush1.bf16.msra.mxu0 %v347
    %427 = vmatprep.subr.bf16.mxu0 0
    %428 = vmatpush2.bf16.msra.mxu0 %v362
    %429 = vmatprep.subr.bf16.mxu0 0
    %430 = vmatpush2.bf16.msra.mxu0 %v361
    %431 = vmatprep.subr.bf16.mxu0 0
    %432 = vmatpush2.bf16.msra.mxu0 %v360
    %433 = vmatprep.subr.bf16.mxu0 0
    %434 = vmatpush2.bf16.msra.mxu0 %v359
    %435 = vmatprep.subr.bf16.mxu0 0
    %436 = vmatpush2.bf16.msra.mxu0 %v358
    %437 = vmatprep.subr.bf16.mxu0 0
    %438 = vmatpush2.bf16.msra.mxu0 %v357
    %439 = vmatprep.subr.bf16.mxu0 0
    %440 = vmatpush2.bf16.msra.mxu0 %v356
    %441 = vmatprep.subr.bf16.mxu0 0
    %442 = vmatpush2.bf16.msra.mxu0 %v355
    %443 = vmatprep.mubr.bf16.mxu0 %v76
    %444 = vmatmul.mubr.bf16.gmra.mxu0 %v69
    %v445 = vpop.f32.mrf.mxu0
    %v446 = vadd.f32 0.0, %v445
    %v447 = vpop.f32.mrf.mxu0
    %v448 = vpop.f32.mrf.mxu0
    %v449 = vpop.f32.mrf.mxu0
    %450 = vdwg.mxu0
    %451 = vmatprep.subr.bf16.mxu0 0
    %452 = vmatpush1.bf16.msra.mxu0 %v370
    %453 = vmatprep.subr.bf16.mxu0 0
    %454 = vmatpush1.bf16.msra.mxu0 %v369
    %455 = vmatprep.subr.bf16.mxu0 0
    %456 = vmatpush1.bf16.msra.mxu0 %v368
    %457 = vmatprep.subr.bf16.mxu0 0
    %458 = vmatpush1.bf16.msra.mxu0 %v367
    %459 = vmatprep.subr.bf16.mxu0 0
    %460 = vmatpush1.bf16.msra.mxu0 %v366
    %461 = vmatprep.subr.bf16.mxu0 0
    %462 = vmatpush1.bf16.msra.mxu0 %v365
    %463 = vmatprep.subr.bf16.mxu0 0
    %464 = vmatpush1.bf16.msra.mxu0 %v364
    %465 = vmatprep.subr.bf16.mxu0 0
    %466 = vmatpush1.bf16.msra.mxu0 %v363
    %467 = vmatprep.subr.bf16.mxu0 0
    %468 = vmatpush2.bf16.msra.mxu0 %v378
    %469 = vmatprep.subr.bf16.mxu0 0
    %470 = vmatpush2.bf16.msra.mxu0 %v377
    %471 = vmatprep.subr.bf16.mxu0 0
    %472 = vmatpush2.bf16.msra.mxu0 %v376
    %473 = vmatprep.subr.bf16.mxu0 0
    %474 = vmatpush2.bf16.msra.mxu0 %v375
    %475 = vmatprep.subr.bf16.mxu0 0
    %476 = vmatpush2.bf16.msra.mxu0 %v374
    %477 = vmatprep.subr.bf16.mxu0 0
    %478 = vmatpush2.bf16.msra.mxu0 %v373
    %479 = vmatprep.subr.bf16.mxu0 0
    %480 = vmatpush2.bf16.msra.mxu0 %v372
    %481 = vmatprep.subr.bf16.mxu0 0
    %482 = vmatpush2.bf16.msra.mxu0 %v371
    %483 = vmatprep.mubr.bf16.mxu0 %v90
    %484 = vmatmul.mubr.bf16.gmra.mxu0 %v83
    %v485 = vpop.f32.mrf.mxu0
    %v486 = vadd.f32 %v446, %v485
    %v487 = vpop.f32.mrf.mxu0
    %v488 = vpop.f32.mrf.mxu0
    %v489 = vpop.f32.mrf.mxu0
    %490 = vdwg.mxu0
    %v555 = vunpack.c.l.b16 %v91
    %v556 = vunpack.c.l.b16 %v92
    %v557 = vunpack.c.l.b16 %v93
    %v558 = vunpack.c.l.b16 %v94
    %v559 = vunpack.c.l.b16 %v95
    %v560 = vunpack.c.l.b16 %v96
    %v561 = vunpack.c.l.b16 %v97
    %v562 = vunpack.c.l.b16 %v98
    %v563 = vunpack.c.l.b16 %v99
    %v564 = vunpack.c.l.b16 %v100
    %v565 = vunpack.c.l.b16 %v101
    %v566 = vunpack.c.l.b16 %v102
    %v567 = vunpack.c.l.b16 %v103
    %v568 = vunpack.c.l.b16 %v104
    %v569 = vunpack.c.l.b16 %v105
    %v570 = vunpack.c.l.b16 %v106
    %v571 = vunpack.c.l.b16 %v107
    %v572 = vunpack.c.l.b16 %v108
    %v573 = vunpack.c.l.b16 %v109
    %v574 = vunpack.c.l.b16 %v110
    %v575 = vunpack.c.l.b16 %v111
    %v576 = vunpack.c.l.b16 %v112
    %v577 = vunpack.c.l.b16 %v113
    %v578 = vunpack.c.l.b16 %v114
    %v579 = vunpack.c.l.b16 %v115
    %v580 = vunpack.c.l.b16 %v116
    %v581 = vunpack.c.l.b16 %v117
    %v582 = vunpack.c.l.b16 %v118
    %v583 = vunpack.c.l.b16 %v119
    %v584 = vunpack.c.l.b16 %v120
    %v585 = vunpack.c.l.b16 %v121
    %v586 = vunpack.c.l.b16 %v122
    %v587 = vunpack.c.l.b16 %v123
    %v588 = vunpack.c.l.b16 %v124
    %v589 = vunpack.c.l.b16 %v125
    %v590 = vunpack.c.l.b16 %v126
    %v591 = vunpack.c.l.b16 %v127
    %v592 = vunpack.c.l.b16 %v128
    %v593 = vunpack.c.l.b16 %v129
    %v594 = vunpack.c.l.b16 %v130
    %v595 = vunpack.c.l.b16 %v131
    %v596 = vunpack.c.l.b16 %v132
    %v597 = vunpack.c.l.b16 %v133
    %v598 = vunpack.c.l.b16 %v134
    %v599 = vunpack.c.l.b16 %v135
    %v600 = vunpack.c.l.b16 %v136
    %v601 = vunpack.c.l.b16 %v137
    %v602 = vunpack.c.l.b16 %v138
    %v603 = vunpack.c.l.b16 %v139
    %v604 = vunpack.c.l.b16 %v140
    %v605 = vunpack.c.l.b16 %v141
    %v606 = vunpack.c.l.b16 %v142
    %v607 = vunpack.c.l.b16 %v143
    %v608 = vunpack.c.l.b16 %v144
    %v609 = vunpack.c.l.b16 %v145
    %v610 = vunpack.c.l.b16 %v146
    %v611 = vunpack.c.l.b16 %v147
    %v612 = vunpack.c.l.b16 %v148
    %v613 = vunpack.c.l.b16 %v149
    %v614 = vunpack.c.l.b16 %v150
    %v615 = vunpack.c.l.b16 %v151
    %v616 = vunpack.c.l.b16 %v152
    %v617 = vunpack.c.l.b16 %v153
    %v618 = vunpack.c.l.b16 %v154
    %v619 = vpack.c.b16 %v556, %v555
    %v620 = vpack.c.b16 %v558, %v557
    %v621 = vpack.c.b16 %v560, %v559
    %v622 = vpack.c.b16 %v562, %v561
    %v623 = vpack.c.b16 %v564, %v563
    %v624 = vpack.c.b16 %v566, %v565
    %v625 = vpack.c.b16 %v568, %v567
    %v626 = vpack.c.b16 %v570, %v569
    %v627 = vpack.c.b16 %v572, %v571
    %v628 = vpack.c.b16 %v574, %v573
    %v629 = vpack.c.b16 %v576, %v575
    %v630 = vpack.c.b16 %v578, %v577
    %v631 = vpack.c.b16 %v580, %v579
    %v632 = vpack.c.b16 %v582, %v581
    %v633 = vpack.c.b16 %v584, %v583
    %v634 = vpack.c.b16 %v586, %v585
    %v635 = vpack.c.b16 %v588, %v587
    %v636 = vpack.c.b16 %v590, %v589
    %v637 = vpack.c.b16 %v592, %v591
    %v638 = vpack.c.b16 %v594, %v593
    %v639 = vpack.c.b16 %v596, %v595
    %v640 = vpack.c.b16 %v598, %v597
    %v641 = vpack.c.b16 %v600, %v599
    %v642 = vpack.c.b16 %v602, %v601
    %v643 = vpack.c.b16 %v604, %v603
    %v644 = vpack.c.b16 %v606, %v605
    %v645 = vpack.c.b16 %v608, %v607
    %v646 = vpack.c.b16 %v610, %v609
    %v647 = vpack.c.b16 %v612, %v611
    %v648 = vpack.c.b16 %v614, %v613
    %v649 = vpack.c.b16 %v616, %v615
    %v650 = vpack.c.b16 %v618, %v617
    %683 = vmatprep.subr.bf16.mxu0 0
    %684 = vmatpush1.bf16.msra.mxu0 %v626
    %685 = vmatprep.subr.bf16.mxu0 0
    %686 = vmatpush1.bf16.msra.mxu0 %v625
    %687 = vmatprep.subr.bf16.mxu0 0
    %688 = vmatpush1.bf16.msra.mxu0 %v624
    %689 = vmatprep.subr.bf16.mxu0 0
    %690 = vmatpush1.bf16.msra.mxu0 %v623
    %691 = vmatprep.subr.bf16.mxu0 0
    %692 = vmatpush1.bf16.msra.mxu0 %v622
    %693 = vmatprep.subr.bf16.mxu0 0
    %694 = vmatpush1.bf16.msra.mxu0 %v621
    %695 = vmatprep.subr.bf16.mxu0 0
    %696 = vmatpush1.bf16.msra.mxu0 %v620
    %697 = vmatprep.subr.bf16.mxu0 0
    %698 = vmatpush1.bf16.msra.mxu0 %v619
    %699 = vmatprep.subr.bf16.mxu0 0
    %700 = vmatpush2.bf16.msra.mxu0 %v634
    %701 = vmatprep.subr.bf16.mxu0 0
    %702 = vmatpush2.bf16.msra.mxu0 %v633
    %703 = vmatprep.subr.bf16.mxu0 0
    %704 = vmatpush2.bf16.msra.mxu0 %v632
    %705 = vmatprep.subr.bf16.mxu0 0
    %706 = vmatpush2.bf16.msra.mxu0 %v631
    %707 = vmatprep.subr.bf16.mxu0 0
    %708 = vmatpush2.bf16.msra.mxu0 %v630
    %709 = vmatprep.subr.bf16.mxu0 0
    %710 = vmatpush2.bf16.msra.mxu0 %v629
    %711 = vmatprep.subr.bf16.mxu0 0
    %712 = vmatpush2.bf16.msra.mxu0 %v628
    %713 = vmatprep.subr.bf16.mxu0 0
    %714 = vmatpush2.bf16.msra.mxu0 %v627
    %715 = vmatprep.mubr.bf16.mxu0 %v76
    %716 = vmatmul.mubr.bf16.gmra.mxu0 %v69
    %v717 = vpop.f32.mrf.mxu0
    %v718 = vadd.f32 %v486, %v717
    %v719 = vpop.f32.mrf.mxu0
    %v720 = vpop.f32.mrf.mxu0
    %v721 = vpop.f32.mrf.mxu0
    %722 = vdwg.mxu0
    %723 = vmatprep.subr.bf16.mxu0 0
    %724 = vmatpush1.bf16.msra.mxu0 %v642
    %725 = vmatprep.subr.bf16.mxu0 0
    %726 = vmatpush1.bf16.msra.mxu0 %v641
    %727 = vmatprep.subr.bf16.mxu0 0
    %728 = vmatpush1.bf16.msra.mxu0 %v640
    %729 = vmatprep.subr.bf16.mxu0 0
    %730 = vmatpush1.bf16.msra.mxu0 %v639
    %731 = vmatprep.subr.bf16.mxu0 0
    %732 = vmatpush1.bf16.msra.mxu0 %v638
    %733 = vmatprep.subr.bf16.mxu0 0
    %734 = vmatpush1.bf16.msra.mxu0 %v637
    %735 = vmatprep.subr.bf16.mxu0 0
    %736 = vmatpush1.bf16.msra.mxu0 %v636
    %737 = vmatprep.subr.bf16.mxu0 0
    %738 = vmatpush1.bf16.msra.mxu0 %v635
    %739 = vmatprep.subr.bf16.mxu0 0
    %740 = vmatpush2.bf16.msra.mxu0 %v650
    %741 = vmatprep.subr.bf16.mxu0 0
    %742 = vmatpush2.bf16.msra.mxu0 %v649
    %743 = vmatprep.subr.bf16.mxu0 0
    %744 = vmatpush2.bf16.msra.mxu0 %v648
    %745 = vmatprep.subr.bf16.mxu0 0
    %746 = vmatpush2.bf16.msra.mxu0 %v647
    %747 = vmatprep.subr.bf16.mxu0 0
    %748 = vmatpush2.bf16.msra.mxu0 %v646
    %749 = vmatprep.subr.bf16.mxu0 0
    %750 = vmatpush2.bf16.msra.mxu0 %v645
    %751 = vmatprep.subr.bf16.mxu0 0
    %752 = vmatpush2.bf16.msra.mxu0 %v644
    %753 = vmatprep.subr.bf16.mxu0 0
    %754 = vmatpush2.bf16.msra.mxu0 %v643
    %755 = vmatprep.mubr.bf16.mxu0 %v90
    %756 = vmatmul.mubr.bf16.gmra.mxu0 %v83
    %v757 = vpop.f32.mrf.mxu0
    %v758 = vadd.f32 %v718, %v757
    %v759 = vpop.f32.mrf.mxu0
    %v760 = vpop.f32.mrf.mxu0
    %v761 = vpop.f32.mrf.mxu0
    %762 = vdwg.mxu0
    %v763 = vld [vmem:[#allocation7] sm:$0xf]
    %v764 = vld [vmem:[#allocation7 + $0x4] sm:$0xf]
    %v765 = vld [vmem:[#allocation7 + $0x8] sm:$0xf]
    %v766 = vld [vmem:[#allocation7 + $0xc] sm:$0xf]
    %v767 = vld [vmem:[#allocation7 + $0x10] sm:$0xf]
    %v768 = vld [vmem:[#allocation7 + $0x14] sm:$0xf]
    %v769 = vld [vmem:[#allocation7 + $0x18] sm:$0xf]
    %v770 = vld [vmem:[#allocation7 + $0x1c] sm:$0xf]
    %v771 = vld [vmem:[#allocation7 + $0x20] sm:$0xf]
    %v772 = vld [vmem:[#allocation7 + $0x24] sm:$0xf]
    %v773 = vld [vmem:[#allocation7 + $0x28] sm:$0xf]
    %v774 = vld [vmem:[#allocation7 + $0x2c] sm:$0xf]
    %v775 = vld [vmem:[#allocation7 + $0x30] sm:$0xf]
    %v776 = vld [vmem:[#allocation7 + $0x34] sm:$0xf]
    %v777 = vld [vmem:[#allocation7 + $0x38] sm:$0xf]
    %v778 = vld [vmem:[#allocation7 + $0x3c] sm:$0xf]
    %v779 = vld [vmem:[#allocation7 + $0x40] sm:$0xf]
    %v780 = vld [vmem:[#allocation7 + $0x44] sm:$0xf]
    %v781 = vld [vmem:[#allocation7 + $0x48] sm:$0xf]
    %v782 = vld [vmem:[#allocation7 + $0x4c] sm:$0xf]
    %v783 = vld [vmem:[#allocation7 + $0x50] sm:$0xf]
    %v784 = vld [vmem:[#allocation7 + $0x54] sm:$0xf]
    %v785 = vld [vmem:[#allocation7 + $0x58] sm:$0xf]
    %v786 = vld [vmem:[#allocation7 + $0x5c] sm:$0xf]
    %v787 = vld [vmem:[#allocation7 + $0x60] sm:$0xf]
    %v788 = vld [vmem:[#allocation7 + $0x64] sm:$0xf]
    %v789 = vld [vmem:[#allocation7 + $0x68] sm:$0xf]
    %v790 = vld [vmem:[#allocation7 + $0x6c] sm:$0xf]
    %v791 = vld [vmem:[#allocation7 + $0x70] sm:$0xf]
    %v792 = vld [vmem:[#allocation7 + $0x74] sm:$0xf]
    %v793 = vld [vmem:[#allocation7 + $0x78] sm:$0xf]
    %v794 = vld [vmem:[#allocation7 + $0x7c] sm:$0xf]
    %v795 = vld [vmem:[#allocation7 + $0x80] sm:$0xf]
    %v796 = vld [vmem:[#allocation7 + $0x84] sm:$0xf]
    %v797 = vld [vmem:[#allocation7 + $0x88] sm:$0xf]
    %v798 = vld [vmem:[#allocation7 + $0x8c] sm:$0xf]
    %v799 = vld [vmem:[#allocation7 + $0x90] sm:$0xf]
    %v800 = vld [vmem:[#allocation7 + $0x94] sm:$0xf]
    %v801 = vld [vmem:[#allocation7 + $0x98] sm:$0xf]
    %v802 = vld [vmem:[#allocation7 + $0x9c] sm:$0xf]
    %v803 = vld [vmem:[#allocation7 + $0xa0] sm:$0xf]
    %v804 = vld [vmem:[#allocation7 + $0xa4] sm:$0xf]
    %v805 = vld [vmem:[#allocation7 + $0xa8] sm:$0xf]
    %v806 = vld [vmem:[#allocation7 + $0xac] sm:$0xf]
    %v807 = vld [vmem:[#allocation7 + $0xb0] sm:$0xf]
    %v808 = vld [vmem:[#allocation7 + $0xb4] sm:$0xf]
    %v809 = vld [vmem:[#allocation7 + $0xb8] sm:$0xf]
    %v810 = vld [vmem:[#allocation7 + $0xbc] sm:$0xf]
    %v811 = vld [vmem:[#allocation7 + $0xc0] sm:$0xf]
    %v812 = vld [vmem:[#allocation7 + $0xc4] sm:$0xf]
    %v813 = vld [vmem:[#allocation7 + $0xc8] sm:$0xf]
    %v814 = vld [vmem:[#allocation7 + $0xcc] sm:$0xf]
    %v815 = vld [vmem:[#allocation7 + $0xd0] sm:$0xf]
    %v816 = vld [vmem:[#allocation7 + $0xd4] sm:$0xf]
    %v817 = vld [vmem:[#allocation7 + $0xd8] sm:$0xf]
    %v818 = vld [vmem:[#allocation7 + $0xdc] sm:$0xf]
    %v819 = vld [vmem:[#allocation7 + $0xe0] sm:$0xf]
    %v820 = vld [vmem:[#allocation7 + $0xe4] sm:$0xf]
    %v821 = vld [vmem:[#allocation7 + $0xe8] sm:$0xf]
    %v822 = vld [vmem:[#allocation7 + $0xec] sm:$0xf]
    %v823 = vld [vmem:[#allocation7 + $0xf0] sm:$0xf]
    %v824 = vld [vmem:[#allocation7 + $0xf4] sm:$0xf]
    %v825 = vld [vmem:[#allocation7 + $0xf8] sm:$0xf]
    %v826 = vld [vmem:[#allocation7 + $0xfc] sm:$0xf]
    %v891 = vunpack.c.l.b16 %v763
    %v892 = vunpack.c.l.b16 %v764
    %v893 = vunpack.c.l.b16 %v765
    %v894 = vunpack.c.l.b16 %v766
    %v895 = vunpack.c.l.b16 %v767
    %v896 = vunpack.c.l.b16 %v768
    %v897 = vunpack.c.l.b16 %v769
    %v898 = vunpack.c.l.b16 %v770
    %v899 = vunpack.c.l.b16 %v771
    %v900 = vunpack.c.l.b16 %v772
    %v901 = vunpack.c.l.b16 %v773
    %v902 = vunpack.c.l.b16 %v774
    %v903 = vunpack.c.l.b16 %v775
    %v904 = vunpack.c.l.b16 %v776
    %v905 = vunpack.c.l.b16 %v777
    %v906 = vunpack.c.l.b16 %v778
    %v907 = vunpack.c.l.b16 %v779
    %v908 = vunpack.c.l.b16 %v780
    %v909 = vunpack.c.l.b16 %v781
    %v910 = vunpack.c.l.b16 %v782
    %v911 = vunpack.c.l.b16 %v783
    %v912 = vunpack.c.l.b16 %v784
    %v913 = vunpack.c.l.b16 %v785
    %v914 = vunpack.c.l.b16 %v786
    %v915 = vunpack.c.l.b16 %v787
    %v916 = vunpack.c.l.b16 %v788
    %v917 = vunpack.c.l.b16 %v789
    %v918 = vunpack.c.l.b16 %v790
    %v919 = vunpack.c.l.b16 %v791
    %v920 = vunpack.c.l.b16 %v792
    %v921 = vunpack.c.l.b16 %v793
    %v922 = vunpack.c.l.b16 %v794
    %v923 = vunpack.c.l.b16 %v795
    %v924 = vunpack.c.l.b16 %v796
    %v925 = vunpack.c.l.b16 %v797
    %v926 = vunpack.c.l.b16 %v798
    %v927 = vunpack.c.l.b16 %v799
    %v928 = vunpack.c.l.b16 %v800
    %v929 = vunpack.c.l.b16 %v801
    %v930 = vunpack.c.l.b16 %v802
    %v931 = vunpack.c.l.b16 %v803
    %v932 = vunpack.c.l.b16 %v804
    %v933 = vunpack.c.l.b16 %v805
    %v934 = vunpack.c.l.b16 %v806
    %v935 = vunpack.c.l.b16 %v807
    %v936 = vunpack.c.l.b16 %v808
    %v937 = vunpack.c.l.b16 %v809
    %v938 = vunpack.c.l.b16 %v810
    %v939 = vunpack.c.l.b16 %v811
    %v940 = vunpack.c.l.b16 %v812
    %v941 = vunpack.c.l.b16 %v813
    %v942 = vunpack.c.l.b16 %v814
    %v943 = vunpack.c.l.b16 %v815
    %v944 = vunpack.c.l.b16 %v816
    %v945 = vunpack.c.l.b16 %v817
    %v946 = vunpack.c.l.b16 %v818
    %v947 = vunpack.c.l.b16 %v819
    %v948 = vunpack.c.l.b16 %v820
    %v949 = vunpack.c.l.b16 %v821
    %v950 = vunpack.c.l.b16 %v822
    %v951 = vunpack.c.l.b16 %v823
    %v952 = vunpack.c.l.b16 %v824
    %v953 = vunpack.c.l.b16 %v825
    %v954 = vunpack.c.l.b16 %v826
    %v955 = vpack.c.b16 %v892, %v891
    %v956 = vpack.c.b16 %v894, %v893
    %v957 = vpack.c.b16 %v896, %v895
    %v958 = vpack.c.b16 %v898, %v897
    %v959 = vpack.c.b16 %v900, %v899
    %v960 = vpack.c.b16 %v902, %v901
    %v961 = vpack.c.b16 %v904, %v903
    %v962 = vpack.c.b16 %v906, %v905
    %v963 = vpack.c.b16 %v908, %v907
    %v964 = vpack.c.b16 %v910, %v909
    %v965 = vpack.c.b16 %v912, %v911
    %v966 = vpack.c.b16 %v914, %v913
    %v967 = vpack.c.b16 %v916, %v915
    %v968 = vpack.c.b16 %v918, %v917
    %v969 = vpack.c.b16 %v920, %v919
    %v970 = vpack.c.b16 %v922, %v921
    %v971 = vpack.c.b16 %v924, %v923
    %v972 = vpack.c.b16 %v926, %v925
    %v973 = vpack.c.b16 %v928, %v927
    %v974 = vpack.c.b16 %v930, %v929
    %v975 = vpack.c.b16 %v932, %v931
    %v976 = vpack.c.b16 %v934, %v933
    %v977 = vpack.c.b16 %v936, %v935
    %v978 = vpack.c.b16 %v938, %v937
    %v979 = vpack.c.b16 %v940, %v939
    %v980 = vpack.c.b16 %v942, %v941
    %v981 = vpack.c.b16 %v944, %v943
    %v982 = vpack.c.b16 %v946, %v945
    %v983 = vpack.c.b16 %v948, %v947
    %v984 = vpack.c.b16 %v950, %v949
    %v985 = vpack.c.b16 %v952, %v951
    %v986 = vpack.c.b16 %v954, %v953
    %1019 = vmatprep.subr.bf16.mxu0 0
    %1020 = vmatpush1.bf16.msra.mxu0 %v962
    %1021 = vmatprep.subr.bf16.mxu0 0
    %1022 = vmatpush1.bf16.msra.mxu0 %v961
    %1023 = vmatprep.subr.bf16.mxu0 0
    %1024 = vmatpush1.bf16.msra.mxu0 %v960
    %1025 = vmatprep.subr.bf16.mxu0 0
    %1026 = vmatpush1.bf16.msra.mxu0 %v959
    %1027 = vmatprep.subr.bf16.mxu0 0
    %1028 = vmatpush1.bf16.msra.mxu0 %v958
    %1029 = vmatprep.subr.bf16.mxu0 0
    %1030 = vmatpush1.bf16.msra.mxu0 %v957
    %1031 = vmatprep.subr.bf16.mxu0 0
    %1032 = vmatpush1.bf16.msra.mxu0 %v956
    %1033 = vmatprep.subr.bf16.mxu0 0
    %1034 = vmatpush1.bf16.msra.mxu0 %v955
    %1035 = vmatprep.subr.bf16.mxu0 0
    %1036 = vmatpush2.bf16.msra.mxu0 %v970
    %1037 = vmatprep.subr.bf16.mxu0 0
    %1038 = vmatpush2.bf16.msra.mxu0 %v969
    %1039 = vmatprep.subr.bf16.mxu0 0
    %1040 = vmatpush2.bf16.msra.mxu0 %v968
    %1041 = vmatprep.subr.bf16.mxu0 0
    %1042 = vmatpush2.bf16.msra.mxu0 %v967
    %1043 = vmatprep.subr.bf16.mxu0 0
    %1044 = vmatpush2.bf16.msra.mxu0 %v966
    %1045 = vmatprep.subr.bf16.mxu0 0
    %1046 = vmatpush2.bf16.msra.mxu0 %v965
    %1047 = vmatprep.subr.bf16.mxu0 0
    %1048 = vmatpush2.bf16.msra.mxu0 %v964
    %1049 = vmatprep.subr.bf16.mxu0 0
    %1050 = vmatpush2.bf16.msra.mxu0 %v963
    %1051 = vmatprep.mubr.bf16.mxu0 %v76
    %1052 = vmatmul.mubr.bf16.gmra.mxu0 %v69
    %v1053 = vpop.f32.mrf.mxu0
    %v1054 = vadd.f32 0.0, %v1053
    %v1055 = vpop.f32.mrf.mxu0
    %v1056 = vpop.f32.mrf.mxu0
    %v1057 = vpop.f32.mrf.mxu0
    %1058 = vdwg.mxu0
    %1059 = vmatprep.subr.bf16.mxu0 0
    %1060 = vmatpush1.bf16.msra.mxu0 %v978
    %1061 = vmatprep.subr.bf16.mxu0 0
    %1062 = vmatpush1.bf16.msra.mxu0 %v977
    %1063 = vmatprep.subr.bf16.mxu0 0
    %1064 = vmatpush1.bf16.msra.mxu0 %v976
    %1065 = vmatprep.subr.bf16.mxu0 0
    %1066 = vmatpush1.bf16.msra.mxu0 %v975
    %1067 = vmatprep.subr.bf16.mxu0 0
    %1068 = vmatpush1.bf16.msra.mxu0 %v974
    %1069 = vmatprep.subr.bf16.mxu0 0
    %1070 = vmatpush1.bf16.msra.mxu0 %v973
    %1071 = vmatprep.subr.bf16.mxu0 0
    %1072 = vmatpush1.bf16.msra.mxu0 %v972
    %1073 = vmatprep.subr.bf16.mxu0 0
    %1074 = vmatpush1.bf16.msra.mxu0 %v971
    %1075 = vmatprep.subr.bf16.mxu0 0
    %1076 = vmatpush2.bf16.msra.mxu0 %v986
    %1077 = vmatprep.subr.bf16.mxu0 0
    %1078 = vmatpush2.bf16.msra.mxu0 %v985
    %1079 = vmatprep.subr.bf16.mxu0 0
    %1080 = vmatpush2.bf16.msra.mxu0 %v984
    %1081 = vmatprep.subr.bf16.mxu0 0
    %1082 = vmatpush2.bf16.msra.mxu0 %v983
    %1083 = vmatprep.subr.bf16.mxu0 0
    %1084 = vmatpush2.bf16.msra.mxu0 %v982
    %1085 = vmatprep.subr.bf16.mxu0 0
    %1086 = vmatpush2.bf16.msra.mxu0 %v981
    %1087 = vmatprep.subr.bf16.mxu0 0
    %1088 = vmatpush2.bf16.msra.mxu0 %v980
    %1089 = vmatprep.subr.bf16.mxu0 0
    %1090 = vmatpush2.bf16.msra.mxu0 %v979
    %1091 = vmatprep.mubr.bf16.mxu0 %v90
    %1092 = vmatmul.mubr.bf16.gmra.mxu0 %v83
    %v1093 = vpop.f32.mrf.mxu0
    %v1094 = vadd.f32 %v1054, %v1093
    %v1095 = vpop.f32.mrf.mxu0
    %v1096 = vpop.f32.mrf.mxu0
    %v1097 = vpop.f32.mrf.mxu0
    %1098 = vdwg.mxu0
    %v1099 = vadd.f32 %v758, %v1094
    %1100 = vst [vmem:[#allocation8] sm:$0xff] %v1099
    // Predicated region
    $region30: #{tpu_custom_call.1} parent=1 // pred_check
      _
    $region31: #{tpu_custom_call.1} parent=1 // pred_check_branch
      %1102 = sbr.rel (0) target = $region33
    $region32: #{tpu_custom_call.1} parent=1 // pred_region
      %s1104 = ssub.s32 128, 128
      %1105 = vsyncadd [#allocation4], %s1104
      %s1107 = sshll.u32 [#allocation8], 4
      %s1108 = int_to_ptr.vmem [resolvable:$true] %s1107
      %1110 = dma.vmem_to_hbm [thread:$0]  %s1108, 128, %s4, [#allocation4]
    $region33: #{tpu_custom_call.1} parent=1 // pred_fallthru
      _
    // Predicated region
    $region34: #{tpu_custom_call.1} parent=1 // pred_check
      _
    $region35: #{tpu_custom_call.1} parent=1 // pred_check_branch
      %1112 = sbr.rel (0) target = $region37
    $region36: #{tpu_custom_call.1} parent=1 // pred_region
      %1113 = dma.done [#allocation4], 128
    $region37: #{tpu_custom_call.1} parent=1 // pred_fallthru
      _
    %1114 = vsyncpa [#allocation3], 1
    %1115 = vsyncpa [#allocation6], 1
    %1116 = vsyncpa [#allocation4], 1

</llo_original>
